<compile_context>
chip_gen: v6e
topology: v6e:2x2x1
jax: 0.10.0
libtpu: 0.0.40
codegen_flags: <defaults>
</compile_context>

<pallas_src>
import functools

import jax
import jax.numpy as jnp
from jax.experimental import pallas as pl
from jax.experimental.pallas import tpu as pltpu


def _linear_kernel(x_ref, w_ref, b_ref, o_ref):
    """One (tm, N) output tile: out = x @ W_t + b in a single MXU shot."""
    o_ref[...] = (
        jnp.dot(x_ref[...], w_ref[...], preferred_element_type=jnp.float32)
        + b_ref[...]
    ).astype(o_ref.dtype)


def _round_up(x, m):
    return (x + m - 1) // m * m


def _cdiv(a, b):
    return -(-a // b)


# Below this many (padded) batch rows a megacore split is not worth a second
# grid step; above it we always emit an even number of >=2 grid steps.
_MIN_SPLIT_ROWS = 256

# v7x has 64 MiB physical VMEM per TensorCore; tm=4096 with double-buffered
# x/out tiles (~26 MB) is the largest tile that leaves comfortable headroom.
_MAX_TILE_ROWS = 4096


def _choose_tile(batch, tm):
    """Pick the batch-tile size (multiple of 8, capped for v7x VMEM)."""
    b_pad = _round_up(batch, 8)
    tm = _round_up(max(8, min(tm, _MAX_TILE_ROWS)), 8)
    if b_pad <= _MIN_SPLIT_ROWS:
        # Tiny batch: a single grid step; splitting would only add overhead.
        return min(tm, b_pad)
    # Guarantee >= 2 grid steps, and an even count so the two TensorCores on
    # v7x get balanced work under dimension_semantics=("parallel",).
    n_tiles = max(2, _cdiv(b_pad, tm))
    n_tiles += n_tiles % 2
    return min(tm, _round_up(_cdiv(b_pad, n_tiles), 8))


@functools.partial(jax.jit, static_argnames=("tm", "use_bf16"))
def linear_pallas(x, w_t, b, *, tm=2048, use_bf16=False):
    """out = x @ w_t + b  using a Pallas TPU kernel.

    x:   (B, K)  float32 (streamed in bf16 if use_bf16=True)
    w_t: (K, N)  float32 (PyTorch weight transposed; bf16 if use_bf16=True)
    b:   (N,)    float32 (always f32; added after the f32 accumulate)
    """
    B, K = x.shape
    Kw, N = w_t.shape
    assert K == Kw

    out_dtype = jnp.float32
    if use_bf16:
        # Halve HBM traffic on the dominant x stream and use the bf16 MXU
        # path; accumulation stays f32 inside the kernel.
        x = x.astype(jnp.bfloat16)
        w_t = w_t.astype(jnp.bfloat16)

    b2 = b.astype(jnp.float32).reshape(1, N)

    tm_eff = _choose_tile(B, tm)
    grid = (pl.cdiv(B, tm_eff),)

    x_bytes = B * K * x.dtype.itemsize
    w_bytes = K * N * w_t.dtype.itemsize
    b_bytes = N * b2.dtype.itemsize
    o_bytes = B * N * jnp.dtype(out_dtype).itemsize

    return pl.pallas_call(
        _linear_kernel,
        out_shape=jax.ShapeDtypeStruct((B, N), out_dtype),
        grid=grid,
        in_specs=[
            pl.BlockSpec((tm_eff, K), lambda i: (i, 0)),  # x tile, streamed
            pl.BlockSpec((K, N), lambda i: (0, 0)),       # weight, resident
            pl.BlockSpec((1, N), lambda i: (0, 0)),       # bias, resident
        ],
        out_specs=pl.BlockSpec((tm_eff, N), lambda i: (i, 0)),
        compiler_params=pltpu.CompilerParams(
            dimension_semantics=("parallel",),
            # Raise the scoped VMEM limit past v5e's 16 MiB default so the
            # 2048-row tile double-buffers with headroom; 32 MiB also fits
            # inside v7x's 64 MiB physical VMEM.
            vmem_limit_bytes=32 * 1024 * 1024,
        ),
        cost_estimate=pl.CostEstimate(
            flops=2 * B * K * N,
            transcendentals=0,
            bytes_accessed=x_bytes + w_bytes + b_bytes + o_bytes,
        ),
    )(x, w_t, b2)


def init_wide_resnet_linear_params(key, dim_e=640, feature_dim=128):
    """Deterministic init mimicking nn.Linear default (uniform +/- 1/sqrt(in))."""
    kw, kb = jax.random.split(key)
    bound = 1.0 / jnp.sqrt(dim_e)
    w = jax.random.uniform(
        kw, (feature_dim, dim_e), jnp.float32, minval=-bound, maxval=bound
    )
    b = jax.random.uniform(
        kb, (feature_dim,), jnp.float32, minval=-bound, maxval=bound
    )
    return w, b


if __name__ == "__main__":
    key = jax.random.PRNGKey(0)
    k_x, k_x2, k_p = jax.random.split(key, 3)

    dim_e = 640          # fixed by the module (WideResNet-28-10 embedding dim)
    feature_dim = 128

    w, b = init_wide_resnet_linear_params(k_p, dim_e, feature_dim)
    w_t = w.T  # (640, 128) -- pre-transpose stays in plain JAX glue.

    # 1) Small batch: single grid step (the shape the module is queried at).
    batch = 8
    x = jax.random.normal(k_x, (batch, dim_e), jnp.float32)
    out = jax.block_until_ready(linear_pallas(x, w_t, b))
    ref = x @ w.T + b
    assert out.shape == (batch, feature_dim)
    assert jnp.allclose(out, ref, atol=2e-5, rtol=1e-5)

    # 2) Larger ragged batch: exercises the even >=2-step megacore split and
    #    the masked tail tile.
    batch2 = 600
    x2 = jax.random.normal(k_x2, (batch2, dim_e), jnp.float32)
    out2 = jax.block_until_ready(linear_pallas(x2, w_t, b))
    ref2 = x2 @ w.T + b
    assert out2.shape == (batch2, feature_dim)
    assert jnp.allclose(out2, ref2, atol=2e-5, rtol=1e-5)

    # 3) Optional bf16 streaming path (f32 accumulate) -- looser tolerance.
    out_bf16 = jax.block_until_ready(linear_pallas(x2, w_t, b, use_bf16=True))
    assert jnp.allclose(out_bf16, ref2, atol=5e-2, rtol=5e-2)

    print("KERNEL_OK")
</pallas_src>

<mosaic_0001>
module attributes {stable_mosaic.version = 11 : i64} {
  func.func @_linear_kernel(%arg0: i32, %arg1: memref<8x640xf32, #tpu.memory_space<vmem>>, %arg2: memref<640x128xf32, #tpu.memory_space<vmem>>, %arg3: memref<1x128xf32, #tpu.memory_space<vmem>>, %arg4: memref<8x128xf32, #tpu.memory_space<vmem>>) attributes {dimension_semantics = [#tpu.dimension_semantics<parallel>], iteration_bounds = array<i64: 1>, scalar_prefetch = 0 : i64, scratch_operands = 0 : i64, tpu.core_type = #tpu.core_type<tc>, window_params = [{transform_indices = @transform_0, window_bounds = array<i64: 8, 640>}, {pipeline_mode = #tpu.pipeline_mode<synchronous>, transform_indices = @transform_1, window_bounds = array<i64: 640, 128>}, {pipeline_mode = #tpu.pipeline_mode<synchronous>, transform_indices = @transform_2, window_bounds = array<i64: 1, 128>}, {transform_indices = @transform_3, window_bounds = array<i64: 8, 128>}]} {
    %c0 = arith.constant 0 : index
    %c0_0 = arith.constant 0 : index
    %0 = vector.load %arg1[%c0, %c0_0] : memref<8x640xf32, #tpu.memory_space<vmem>>, vector<8x640xf32>
    %c0_1 = arith.constant 0 : index
    %c0_2 = arith.constant 0 : index
    %1 = vector.load %arg2[%c0_1, %c0_2] : memref<640x128xf32, #tpu.memory_space<vmem>>, vector<640x128xf32>
    %cst = arith.constant dense<0.000000e+00> : vector<8x128xf32>
    %2 = tpu.matmul %0, %1, %cst {dimension_numbers = #tpu.dot_dimension_numbers<[1], [0], [0], [1], [0, 0, 1, 1], [], []>} : vector<8x640xf32>, vector<640x128xf32>, vector<8x128xf32> -> vector<8x128xf32>
    %c0_3 = arith.constant 0 : index
    %c0_4 = arith.constant 0 : index
    %3 = vector.load %arg3[%c0_3, %c0_4] : memref<1x128xf32, #tpu.memory_space<vmem>>, vector<1x128xf32>
    %4 = vector.broadcast %3 : vector<1x128xf32> to vector<8x128xf32>
    %5 = arith.addf %2, %4 : vector<8x128xf32>
    %c0_5 = arith.constant 0 : index
    %c0_6 = arith.constant 0 : index
    %6 = vector.load %arg4[%c0_5, %c0_6] : memref<8x128xf32, #tpu.memory_space<vmem>>, vector<8x128xf32>
    tpu.vector_store %arg4[%c0_5, %c0_6], %5 {strides = array<i32>} : memref<8x128xf32, #tpu.memory_space<vmem>>, vector<8x128xf32>,
    return
  }
  func.func @transform_0(%arg0: i32) -> (i32, i32) {
    %c0_i32 = arith.constant 0 : i32
    %c0_i32_0 = arith.constant 0 : i32
    return %arg0, %c0_i32 : i32, i32
  }
  func.func @transform_1(%arg0: i32) -> (i32, i32) {
    %c0_i32 = arith.constant 0 : i32
    %c0_i32_0 = arith.constant 0 : i32
    %c0_i32_1 = arith.constant 0 : i32
    return %c0_i32, %c0_i32_0 : i32, i32
  }
  func.func @transform_2(%arg0: i32) -> (i32, i32) {
    %c0_i32 = arith.constant 0 : i32
    %c0_i32_0 = arith.constant 0 : i32
    %c0_i32_1 = arith.constant 0 : i32
    return %c0_i32, %c0_i32_0 : i32, i32
  }
  func.func @transform_3(%arg0: i32) -> (i32, i32) {
    %c0_i32 = arith.constant 0 : i32
    %c0_i32_0 = arith.constant 0 : i32
    return %arg0, %c0_i32 : i32, i32
  }
}

</mosaic_0001>

<llo_original>
// kernel: linear_pallas.1
$region0: #{linear_pallas.1}
  #allocation0 [shape = 'u32[]', space=smem, size = 0x4, offset = 0x4, fixed_abs, tag = 'smem constant byte address 0x4 - core index']
  #allocation1 [shape = 'u32[144,128]{1,0:T(1,128)}', space=vmem, size = 0x12000, scoped, tag = 'internal scratch']
  %s0 = inlined_call_operand.hbm [shape: f32[8,640], index: 0, kind: input, shape index: {}]
  %s1 = inlined_call_operand.hbm [shape: f32[640,128], index: 1, kind: input, shape index: {}]
  %s2 = inlined_call_operand.vmem [shape: f32[1,128], index: 2, kind: input, shape index: {}]
  %s3 = inlined_call_operand.hbm [shape: f32[8,128], index: 3, kind: output, shape index: {}]
  %s4 = sld [smem:[#allocation0]]
  $region30: #{linear_pallas.1} parent=0
    _
  %s6 = ssub.s32 1, %s4
  %s7 = scalar_select 0, %s6, %s4
  $region1: #{linear_pallas.1} parent=0
    #allocation2 [shape = 'u8[20480]{0}', space=vmem, size = 0x5000, scoped, tag = 'input window, operand 0, single buffered']
    #allocation3 [shape = 's32[1]{0}', space=sflag, size = 0x4, scoped, tag = 'scoped memory for linear_pallas.1']
    #allocation4 [shape = 's32[1]{0}', space=sflag, size = 0x4, scoped, tag = 'scoped memory for linear_pallas.1']
    #allocation5 [shape = 'u8[327680]{0}', space=vmem, size = 0x50000, scoped, tag = 'input window, operand 1, single buffered']
    #allocation6 [shape = 's32[1]{0}', space=sflag, size = 0x4, scoped, tag = 'scoped memory for linear_pallas.1']
    #allocation7 [shape = 'u8[4096]{0}', space=vmem, size = 0x1000, scoped, tag = 'output window, operand 0, single buffered']
    %8 = vsyncpa [#allocation3], 0
    %9 = vsyncpa [#allocation6], 0
    %10 = vsyncpa [#allocation4], 0
    // Predicated region
    $region2: #{linear_pallas.1} parent=1 // pred_check
      _
    $region3: #{linear_pallas.1} parent=1 // pred_check_branch
      %12 = sbr.rel (0) target = $region5
    $region4: #{linear_pallas.1} parent=1 // pred_region
      %s14 = ssub.s32 640, 640
      %15 = vsyncadd [#allocation3], %s14
      %s17 = sshll.u32 [#allocation2], 4
      %s18 = int_to_ptr.vmem [resolvable:$true] %s17
      %20 = dma.hbm_to_vmem [thread:$0]  %s0, 640, %s18, [#allocation3]
    $region5: #{linear_pallas.1} parent=1 // pred_fallthru
      _
    // Predicated region
    $region6: #{linear_pallas.1} parent=1 // pred_check
      _
    $region7: #{linear_pallas.1} parent=1 // pred_check_branch
      %22 = sbr.rel (0) target = $region9
    $region8: #{linear_pallas.1} parent=1 // pred_region
      %s24 = ssub.s32 10240, 10240
      %25 = vsyncadd [#allocation6], %s24
      %s26 = sshll.u32 [#allocation5], 4
      %s27 = int_to_ptr.vmem [resolvable:$true] %s26
      %32 = dma.hbm_to_vmem [thread:$0]  %s1, 10240, %s27, [#allocation6], 128, 128, 8
    $region9: #{linear_pallas.1} parent=1 // pred_fallthru
      _
    // Predicated region
    $region10: #{linear_pallas.1} parent=1 // pred_check
      _
    $region11: #{linear_pallas.1} parent=1 // pred_check_branch
      %34 = sbr.rel (0) target = $region13
    $region12: #{linear_pallas.1} parent=1 // pred_region
      _
    $region13: #{linear_pallas.1} parent=1 // pred_fallthru
      _
    // Predicated region
    $region14: #{linear_pallas.1} parent=1 // pred_check
      _
    $region15: #{linear_pallas.1} parent=1 // pred_check_branch
      %36 = sbr.rel (0) target = $region17
    $region16: #{linear_pallas.1} parent=1 // pred_region
      %37 = dma.done [#allocation3], 640
    $region17: #{linear_pallas.1} parent=1 // pred_fallthru
      _
    // Predicated region
    $region18: #{linear_pallas.1} parent=1 // pred_check
      _
    $region19: #{linear_pallas.1} parent=1 // pred_check_branch
      %39 = sbr.rel (0) target = $region21
    $region20: #{linear_pallas.1} parent=1 // pred_region
      %40 = dma.done [#allocation6], 10240
    $region21: #{linear_pallas.1} parent=1 // pred_fallthru
      _
    %v41 = vld [vmem:[#allocation2] sm:$0xff]
    %v42 = vld [vmem:[#allocation2 + $0x8] sm:$0xff]
    %v43 = vld [vmem:[#allocation2 + $0x10] sm:$0xff]
    %v44 = vld [vmem:[#allocation2 + $0x18] sm:$0xff]
    %v45 = vld [vmem:[#allocation2 + $0x20] sm:$0xff]
    %v46 = vld [vmem:[#allocation5] sm:$0xff]
    %v47 = vld [vmem:[#allocation5 + $0x8] sm:$0xff]
    %v48 = vld [vmem:[#allocation5 + $0x10] sm:$0xff]
    %v49 = vld [vmem:[#allocation5 + $0x18] sm:$0xff]
    %v50 = vld [vmem:[#allocation5 + $0x20] sm:$0xff]
    %v51 = vld [vmem:[#allocation5 + $0x28] sm:$0xff]
    %v52 = vld [vmem:[#allocation5 + $0x30] sm:$0xff]
    %v53 = vld [vmem:[#allocation5 + $0x38] sm:$0xff]
    %v54 = vld [vmem:[#allocation5 + $0x40] sm:$0xff]
    %v55 = vld [vmem:[#allocation5 + $0x48] sm:$0xff]
    %v56 = vld [vmem:[#allocation5 + $0x50] sm:$0xff]
    %v57 = vld [vmem:[#allocation5 + $0x58] sm:$0xff]
    %v58 = vld [vmem:[#allocation5 + $0x60] sm:$0xff]
    %v59 = vld [vmem:[#allocation5 + $0x68] sm:$0xff]
    %v60 = vld [vmem:[#allocation5 + $0x70] sm:$0xff]
    %v61 = vld [vmem:[#allocation5 + $0x78] sm:$0xff]
    %v62 = vld [vmem:[#allocation5 + $0x80] sm:$0xff]
    %v63 = vld [vmem:[#allocation5 + $0x88] sm:$0xff]
    %v64 = vld [vmem:[#allocation5 + $0x90] sm:$0xff]
    %v65 = vld [vmem:[#allocation5 + $0x98] sm:$0xff]
    %v66 = vld [vmem:[#allocation5 + $0xa0] sm:$0xff]
    %v67 = vld [vmem:[#allocation5 + $0xa8] sm:$0xff]
    %v68 = vld [vmem:[#allocation5 + $0xb0] sm:$0xff]
    %v69 = vld [vmem:[#allocation5 + $0xb8] sm:$0xff]
    %v70 = vld [vmem:[#allocation5 + $0xc0] sm:$0xff]
    %v71 = vld [vmem:[#allocation5 + $0xc8] sm:$0xff]
    %v72 = vld [vmem:[#allocation5 + $0xd0] sm:$0xff]
    %v73 = vld [vmem:[#allocation5 + $0xd8] sm:$0xff]
    %v74 = vld [vmem:[#allocation5 + $0xe0] sm:$0xff]
    %v75 = vld [vmem:[#allocation5 + $0xe8] sm:$0xff]
    %v76 = vld [vmem:[#allocation5 + $0xf0] sm:$0xff]
    %v77 = vld [vmem:[#allocation5 + $0xf8] sm:$0xff]
    %v78 = vld [vmem:[#allocation5 + $0x100] sm:$0xff]
    %v79 = vld [vmem:[#allocation5 + $0x108] sm:$0xff]
    %v80 = vld [vmem:[#allocation5 + $0x110] sm:$0xff]
    %v81 = vld [vmem:[#allocation5 + $0x118] sm:$0xff]
    %v82 = vld [vmem:[#allocation5 + $0x120] sm:$0xff]
    %v83 = vld [vmem:[#allocation5 + $0x128] sm:$0xff]
    %v84 = vld [vmem:[#allocation5 + $0x130] sm:$0xff]
    %v85 = vld [vmem:[#allocation5 + $0x138] sm:$0xff]
    %v86 = vld [vmem:[#allocation5 + $0x140] sm:$0xff]
    %v87 = vld [vmem:[#allocation5 + $0x148] sm:$0xff]
    %v88 = vld [vmem:[#allocation5 + $0x150] sm:$0xff]
    %v89 = vld [vmem:[#allocation5 + $0x158] sm:$0xff]
    %v90 = vld [vmem:[#allocation5 + $0x160] sm:$0xff]
    %v91 = vld [vmem:[#allocation5 + $0x168] sm:$0xff]
    %v92 = vld [vmem:[#allocation5 + $0x170] sm:$0xff]
    %v93 = vld [vmem:[#allocation5 + $0x178] sm:$0xff]
    %v94 = vld [vmem:[#allocation5 + $0x180] sm:$0xff]
    %v95 = vld [vmem:[#allocation5 + $0x188] sm:$0xff]
    %v96 = vld [vmem:[#allocation5 + $0x190] sm:$0xff]
    %v97 = vld [vmem:[#allocation5 + $0x198] sm:$0xff]
    %v98 = vld [vmem:[#allocation5 + $0x1a0] sm:$0xff]
    %v99 = vld [vmem:[#allocation5 + $0x1a8] sm:$0xff]
    %v100 = vld [vmem:[#allocation5 + $0x1b0] sm:$0xff]
    %v101 = vld [vmem:[#allocation5 + $0x1b8] sm:$0xff]
    %v102 = vld [vmem:[#allocation5 + $0x1c0] sm:$0xff]
    %v103 = vld [vmem:[#allocation5 + $0x1c8] sm:$0xff]
    %v104 = vld [vmem:[#allocation5 + $0x1d0] sm:$0xff]
    %v105 = vld [vmem:[#allocation5 + $0x1d8] sm:$0xff]
    %v106 = vld [vmem:[#allocation5 + $0x1e0] sm:$0xff]
    %v107 = vld [vmem:[#allocation5 + $0x1e8] sm:$0xff]
    %v108 = vld [vmem:[#allocation5 + $0x1f0] sm:$0xff]
    %v109 = vld [vmem:[#allocation5 + $0x1f8] sm:$0xff]
    %v110 = vld [vmem:[#allocation5 + $0x200] sm:$0xff]
    %v111 = vld [vmem:[#allocation5 + $0x208] sm:$0xff]
    %v112 = vld [vmem:[#allocation5 + $0x210] sm:$0xff]
    %v113 = vld [vmem:[#allocation5 + $0x218] sm:$0xff]
    %v114 = vld [vmem:[#allocation5 + $0x220] sm:$0xff]
    %v115 = vld [vmem:[#allocation5 + $0x228] sm:$0xff]
    %v116 = vld [vmem:[#allocation5 + $0x230] sm:$0xff]
    %v117 = vld [vmem:[#allocation5 + $0x238] sm:$0xff]
    %v118 = vld [vmem:[#allocation5 + $0x240] sm:$0xff]
    %v119 = vld [vmem:[#allocation5 + $0x248] sm:$0xff]
    %v120 = vld [vmem:[#allocation5 + $0x250] sm:$0xff]
    %v121 = vld [vmem:[#allocation5 + $0x258] sm:$0xff]
    %v122 = vld [vmem:[#allocation5 + $0x260] sm:$0xff]
    %v123 = vld [vmem:[#allocation5 + $0x268] sm:$0xff]
    %v124 = vld [vmem:[#allocation5 + $0x270] sm:$0xff]
    %v125 = vld [vmem:[#allocation5 + $0x278] sm:$0xff]
    %v126 = vld [vmem:[%s2] sm:$0x1]
    %v128 = vlaneseq
    %v129 = vshrl.u32 %v128, 7
    %v130 = vsub.s32 0, %v129
    %v131 = vrot.slane %v126, %v130
    %133 = vmatprep.subr.mxu0 0.0
    %134 = vmatpush1.msra.mxu0 %v61
    %135 = vmatprep.subr.mxu0 0.0
    %136 = vmatpush1.msra.mxu0 %v60
    %137 = vmatprep.subr.mxu0 0.0
    %138 = vmatpush1.msra.mxu0 %v59
    %139 = vmatprep.subr.mxu0 0.0
    %140 = vmatpush1.msra.mxu0 %v58
    %141 = vmatprep.subr.mxu0 0.0
    %142 = vmatpush1.msra.mxu0 %v57
    %143 = vmatprep.subr.mxu0 0.0
    %144 = vmatpush1.msra.mxu0 %v56
    %145 = vmatprep.subr.mxu0 0.0
    %146 = vmatpush1.msra.mxu0 %v55
    %147 = vmatprep.subr.mxu0 0.0
    %148 = vmatpush1.msra.mxu0 %v54
    %149 = vmatprep.subr.mxu0 0.0
    %150 = vmatpush1.msra.mxu0 %v53
    %151 = vmatprep.subr.mxu0 0.0
    %152 = vmatpush1.msra.mxu0 %v52
    %153 = vmatprep.subr.mxu0 0.0
    %154 = vmatpush1.msra.mxu0 %v51
    %155 = vmatprep.subr.mxu0 0.0
    %156 = vmatpush1.msra.mxu0 %v50
    %157 = vmatprep.subr.mxu0 0.0
    %158 = vmatpush1.msra.mxu0 %v49
    %159 = vmatprep.subr.mxu0 0.0
    %160 = vmatpush1.msra.mxu0 %v48
    %161 = vmatprep.subr.mxu0 0.0
    %162 = vmatpush1.msra.mxu0 %v47
    %163 = vmatprep.subr.mxu0 0.0
    %164 = vmatpush1.msra.mxu0 %v46
    %165 = vmatprep.subr.mxu0 0.0
    %166 = vmatpush2.msra.mxu0 %v77
    %167 = vmatprep.subr.mxu0 0.0
    %168 = vmatpush2.msra.mxu0 %v76
    %169 = vmatprep.subr.mxu0 0.0
    %170 = vmatpush2.msra.mxu0 %v75
    %171 = vmatprep.subr.mxu0 0.0
    %172 = vmatpush2.msra.mxu0 %v74
    %173 = vmatprep.subr.mxu0 0.0
    %174 = vmatpush2.msra.mxu0 %v73
    %175 = vmatprep.subr.mxu0 0.0
    %176 = vmatpush2.msra.mxu0 %v72
    %177 = vmatprep.subr.mxu0 0.0
    %178 = vmatpush2.msra.mxu0 %v71
    %179 = vmatprep.subr.mxu0 0.0
    %180 = vmatpush2.msra.mxu0 %v70
    %181 = vmatprep.subr.mxu0 0.0
    %182 = vmatpush2.msra.mxu0 %v69
    %183 = vmatprep.subr.mxu0 0.0
    %184 = vmatpush2.msra.mxu0 %v68
    %185 = vmatprep.subr.mxu0 0.0
    %186 = vmatpush2.msra.mxu0 %v67
    %187 = vmatprep.subr.mxu0 0.0
    %188 = vmatpush2.msra.mxu0 %v66
    %189 = vmatprep.subr.mxu0 0.0
    %190 = vmatpush2.msra.mxu0 %v65
    %191 = vmatprep.subr.mxu0 0.0
    %192 = vmatpush2.msra.mxu0 %v64
    %193 = vmatprep.subr.mxu0 0.0
    %194 = vmatpush2.msra.mxu0 %v63
    %195 = vmatprep.subr.mxu0 0.0
    %196 = vmatpush2.msra.mxu0 %v62
    %197 = vmatprep.mubr.f32.mxu0 %v42
    %198 = vmatmul.mubr.f32.gmra.mxu0 %v41
    %v199 = vpop.f32.mrf.mxu0
    %v200 = vadd.f32 %v131, %v199
    %v201 = vpop.f32.mrf.mxu0
    %202 = vdwg.mxu0
    %203 = vmatprep.subr.mxu0 0.0
    %204 = vmatpush1.msra.mxu0 %v93
    %205 = vmatprep.subr.mxu0 0.0
    %206 = vmatpush1.msra.mxu0 %v92
    %207 = vmatprep.subr.mxu0 0.0
    %208 = vmatpush1.msra.mxu0 %v91
    %209 = vmatprep.subr.mxu0 0.0
    %210 = vmatpush1.msra.mxu0 %v90
    %211 = vmatprep.subr.mxu0 0.0
    %212 = vmatpush1.msra.mxu0 %v89
    %213 = vmatprep.subr.mxu0 0.0
    %214 = vmatpush1.msra.mxu0 %v88
    %215 = vmatprep.subr.mxu0 0.0
    %216 = vmatpush1.msra.mxu0 %v87
    %217 = vmatprep.subr.mxu0 0.0
    %218 = vmatpush1.msra.mxu0 %v86
    %219 = vmatprep.subr.mxu0 0.0
    %220 = vmatpush1.msra.mxu0 %v85
    %221 = vmatprep.subr.mxu0 0.0
    %222 = vmatpush1.msra.mxu0 %v84
    %223 = vmatprep.subr.mxu0 0.0
    %224 = vmatpush1.msra.mxu0 %v83
    %225 = vmatprep.subr.mxu0 0.0
    %226 = vmatpush1.msra.mxu0 %v82
    %227 = vmatprep.subr.mxu0 0.0
    %228 = vmatpush1.msra.mxu0 %v81
    %229 = vmatprep.subr.mxu0 0.0
    %230 = vmatpush1.msra.mxu0 %v80
    %231 = vmatprep.subr.mxu0 0.0
    %232 = vmatpush1.msra.mxu0 %v79
    %233 = vmatprep.subr.mxu0 0.0
    %234 = vmatpush1.msra.mxu0 %v78
    %235 = vmatprep.subr.mxu0 0.0
    %236 = vmatpush2.msra.mxu0 %v109
    %237 = vmatprep.subr.mxu0 0.0
    %238 = vmatpush2.msra.mxu0 %v108
    %239 = vmatprep.subr.mxu0 0.0
    %240 = vmatpush2.msra.mxu0 %v107
    %241 = vmatprep.subr.mxu0 0.0
    %242 = vmatpush2.msra.mxu0 %v106
    %243 = vmatprep.subr.mxu0 0.0
    %244 = vmatpush2.msra.mxu0 %v105
    %245 = vmatprep.subr.mxu0 0.0
    %246 = vmatpush2.msra.mxu0 %v104
    %247 = vmatprep.subr.mxu0 0.0
    %248 = vmatpush2.msra.mxu0 %v103
    %249 = vmatprep.subr.mxu0 0.0
    %250 = vmatpush2.msra.mxu0 %v102
    %251 = vmatprep.subr.mxu0 0.0
    %252 = vmatpush2.msra.mxu0 %v101
    %253 = vmatprep.subr.mxu0 0.0
    %254 = vmatpush2.msra.mxu0 %v100
    %255 = vmatprep.subr.mxu0 0.0
    %256 = vmatpush2.msra.mxu0 %v99
    %257 = vmatprep.subr.mxu0 0.0
    %258 = vmatpush2.msra.mxu0 %v98
    %259 = vmatprep.subr.mxu0 0.0
    %260 = vmatpush2.msra.mxu0 %v97
    %261 = vmatprep.subr.mxu0 0.0
    %262 = vmatpush2.msra.mxu0 %v96
    %263 = vmatprep.subr.mxu0 0.0
    %264 = vmatpush2.msra.mxu0 %v95
    %265 = vmatprep.subr.mxu0 0.0
    %266 = vmatpush2.msra.mxu0 %v94
    %267 = vmatprep.mubr.f32.mxu0 %v44
    %268 = vmatmul.mubr.f32.gmra.mxu0 %v43
    %v269 = vpop.f32.mrf.mxu0
    %v270 = vadd.f32 %v200, %v269
    %v271 = vpop.f32.mrf.mxu0
    %272 = vdwg.mxu0
    %273 = vmatprep.subr.mxu0 0.0
    %274 = vmatpush1.msra.mxu0 %v125
    %275 = vmatprep.subr.mxu0 0.0
    %276 = vmatpush1.msra.mxu0 %v124
    %277 = vmatprep.subr.mxu0 0.0
    %278 = vmatpush1.msra.mxu0 %v123
    %279 = vmatprep.subr.mxu0 0.0
    %280 = vmatpush1.msra.mxu0 %v122
    %281 = vmatprep.subr.mxu0 0.0
    %282 = vmatpush1.msra.mxu0 %v121
    %283 = vmatprep.subr.mxu0 0.0
    %284 = vmatpush1.msra.mxu0 %v120
    %285 = vmatprep.subr.mxu0 0.0
    %286 = vmatpush1.msra.mxu0 %v119
    %287 = vmatprep.subr.mxu0 0.0
    %288 = vmatpush1.msra.mxu0 %v118
    %289 = vmatprep.subr.mxu0 0.0
    %290 = vmatpush1.msra.mxu0 %v117
    %291 = vmatprep.subr.mxu0 0.0
    %292 = vmatpush1.msra.mxu0 %v116
    %293 = vmatprep.subr.mxu0 0.0
    %294 = vmatpush1.msra.mxu0 %v115
    %295 = vmatprep.subr.mxu0 0.0
    %296 = vmatpush1.msra.mxu0 %v114
    %297 = vmatprep.subr.mxu0 0.0
    %298 = vmatpush1.msra.mxu0 %v113
    %299 = vmatprep.subr.mxu0 0.0
    %300 = vmatpush1.msra.mxu0 %v112
    %301 = vmatprep.subr.mxu0 0.0
    %302 = vmatpush1.msra.mxu0 %v111
    %303 = vmatprep.subr.mxu0 0.0
    %304 = vmatpush1.msra.mxu0 %v110
    %305 = vmatprep.subr.mxu0 0.0
    %306 = vmatpush2.msra.mxu0 0.0
    %307 = vmatprep.subr.mxu0 0.0
    %308 = vmatpush2.msra.mxu0 0.0
    %309 = vmatprep.subr.mxu0 0.0
    %310 = vmatpush2.msra.mxu0 0.0
    %311 = vmatprep.subr.mxu0 0.0
    %312 = vmatpush2.msra.mxu0 0.0
    %313 = vmatprep.subr.mxu0 0.0
    %314 = vmatpush2.msra.mxu0 0.0
    %315 = vmatprep.subr.mxu0 0.0
    %316 = vmatpush2.msra.mxu0 0.0
    %317 = vmatprep.subr.mxu0 0.0
    %318 = vmatpush2.msra.mxu0 0.0
    %319 = vmatprep.subr.mxu0 0.0
    %320 = vmatpush2.msra.mxu0 0.0
    %321 = vmatprep.subr.mxu0 0.0
    %322 = vmatpush2.msra.mxu0 0.0
    %323 = vmatprep.subr.mxu0 0.0
    %324 = vmatpush2.msra.mxu0 0.0
    %325 = vmatprep.subr.mxu0 0.0
    %326 = vmatpush2.msra.mxu0 0.0
    %327 = vmatprep.subr.mxu0 0.0
    %328 = vmatpush2.msra.mxu0 0.0
    %329 = vmatprep.subr.mxu0 0.0
    %330 = vmatpush2.msra.mxu0 0.0
    %331 = vmatprep.subr.mxu0 0.0
    %332 = vmatpush2.msra.mxu0 0.0
    %333 = vmatprep.subr.mxu0 0.0
    %334 = vmatpush2.msra.mxu0 0.0
    %335 = vmatprep.subr.mxu0 0.0
    %336 = vmatpush2.msra.mxu0 0.0
    %337 = vmatprep.mubr.f32.mxu0 0.0
    %338 = vmatmul.mubr.f32.gmra.mxu0 %v45
    %v339 = vpop.f32.mrf.mxu0
    %v340 = vadd.f32 %v270, %v339
    %v341 = vpop.f32.mrf.mxu0
    %342 = vdwg.mxu0
    %343 = vst [vmem:[#allocation7] sm:$0xff] %v340
    // Predicated region
    $region22: #{linear_pallas.1} parent=1 // pred_check
      _
    $region23: #{linear_pallas.1} parent=1 // pred_check_branch
      %345 = sbr.rel (0) target = $region25
    $region24: #{linear_pallas.1} parent=1 // pred_region
      %s347 = ssub.s32 128, 128
      %348 = vsyncadd [#allocation4], %s347
      %s350 = sshll.u32 [#allocation7], 4
      %s351 = int_to_ptr.vmem [resolvable:$true] %s350
      %353 = dma.vmem_to_hbm [thread:$0]  %s351, 128, %s3, [#allocation4]
    $region25: #{linear_pallas.1} parent=1 // pred_fallthru
      _
    // Predicated region
    $region26: #{linear_pallas.1} parent=1 // pred_check
      _
    $region27: #{linear_pallas.1} parent=1 // pred_check_branch
      %355 = sbr.rel (0) target = $region29
    $region28: #{linear_pallas.1} parent=1 // pred_region
      %356 = dma.done [#allocation4], 128
    $region29: #{linear_pallas.1} parent=1 // pred_fallthru
      _
    %357 = vsyncpa [#allocation3], 1
    %358 = vsyncpa [#allocation6], 1
    %359 = vsyncpa [#allocation4], 1

</llo_original>
